<compile_context>
chip_gen: v7x
topology: tpu7x:2x2x1
jax: 0.10.0
libtpu: 0.0.40
codegen_flags: <defaults>
</compile_context>

<pallas_src>
import functools

import jax
import jax.numpy as jnp
from jax.experimental import pallas as pl
from jax.experimental.pallas import tpu as pltpu


def folded_mlp_kernel(x_ref, w_ref, b_ref, o_ref):
    # x_ref: (tile_b, F) streamed batch tile (MXU LHS, no transpose)
    # w_ref: (F, 1) stationary folded weight; b_ref: (1, 1) folded bias.
    y = jax.lax.dot_general(
        x_ref[...], w_ref[...],
        dimension_numbers=(((1,), (0,)), ((), ())),
        preferred_element_type=jnp.float32,
        precision=jax.lax.Precision.HIGHEST)
    o_ref[...] = (y + b_ref[...]).astype(o_ref.dtype)


def fold_params(params):
    """Collapse the 5 affine layers into one (F, 1) weight column + (1, 1) bias.

    Dropout is identity at inference, so the composition is exact.  Kept in
    float32 with HIGHEST precision; call ONCE per parameter set (hoisted out
    of the per-call path).
    """
    dot = functools.partial(jnp.dot, precision=jax.lax.Precision.HIGHEST)
    w = dot(dot(dot(dot(params["w1"], params["w2"]), params["w3"]),
                params["w4"]), params["w5"])                       # (F, 1)
    b = dot(params["b1"], params["w2"]) + params["b2"]
    b = dot(b, params["w3"]) + params["b3"]
    b = dot(b, params["w4"]) + params["b4"]
    b = dot(b, params["w5"]) + params["b5"]                        # (1, 1)
    return w.astype(jnp.float32), b.astype(jnp.float32)


def _pick_tile_b(B, F, itemsize, *, per_buffer_budget=8 << 20, min_steps=2,
                 max_tile=4096):
    """Largest multiple-of-128 batch tile that fits the VMEM budget
    (double-buffered x) and still leaves >= `min_steps` grid steps
    (pipelining + v7x dual-TensorCore sharding)."""
    if B <= 256:
        return B                               # tiny batch: one full-batch tile
    cap = min(max_tile,
              per_buffer_budget // (F * itemsize),   # per-buffer x bytes
              max(B // min_steps, 128))              # keep >= min_steps steps
    cap = max(128, (cap // 128) * 128)
    for t in range(cap, 127, -128):            # prefer a tile that divides B
        if B % t == 0:
            return t
    return cap                                 # ragged B: cdiv grid, masked tail


def mlp_forward(x, w_col, b_eff, *, tile_b=None):
    """Inference forward of the folded aesthetic MLP head.

    x: (B, F) in its native dtype.  w_col: (F, 1) f32.  b_eff: (1, 1) f32.
    """
    B, F = x.shape
    assert w_col.shape == (F, 1) and b_eff.shape == (1, 1)
    out_dtype = x.dtype
    # Keep the folded weight in f32 when x is f32 (free); only narrow it when
    # x itself is narrow, since lax.dot_general wants matching input dtypes.
    if w_col.dtype != x.dtype:
        w_col = w_col.astype(x.dtype)

    itemsize = jnp.dtype(x.dtype).itemsize
    if tile_b is None:
        tile_b = _pick_tile_b(B, F, itemsize)
    grid = (pl.cdiv(B, tile_b),)

    cost = pl.CostEstimate(
        flops=2 * B * F + B,
        transcendentals=0,
        bytes_accessed=(B * F * itemsize                    # x stream (dominant)
                        + F * 4 + 4                         # folded weight + bias
                        + B * jnp.dtype(out_dtype).itemsize))

    return pl.pallas_call(
        folded_mlp_kernel,
        out_shape=jax.ShapeDtypeStruct((B, 1), out_dtype),
        grid_spec=pltpu.PrefetchScalarGridSpec(
            num_scalar_prefetch=0,
            grid=grid,
            in_specs=[
                pl.BlockSpec((tile_b, F), lambda i: (i, 0)),  # streamed x tile
                pl.BlockSpec((F, 1), lambda i: (0, 0)),       # stationary weight
                pl.BlockSpec((1, 1), lambda i: (0, 0)),       # folded bias
            ],
            out_specs=pl.BlockSpec((tile_b, 1), lambda i: (i, 0)),
        ),
        compiler_params=pltpu.CompilerParams(
            dimension_semantics=("parallel",),
            vmem_limit_bytes=32 * 1024 * 1024),
        cost_estimate=cost,
    )(x, w_col, b_eff)


def make_mlp_forward(params, *, tile_b=None):
    """Fold the parameters once and return a jitted forward callable."""
    w_col, b_eff = fold_params(params)
    return jax.jit(lambda x: mlp_forward(x, w_col, b_eff, tile_b=tile_b))


def init_params(key, input_size):
    """Deterministic synthetic init. Weights stored as (in, out); biases as (1, out)."""
    dims = [(input_size, 1024), (1024, 128), (128, 64), (64, 16), (16, 1)]
    params = {}
    for idx, (fan_in, fan_out) in enumerate(dims, start=1):
        key, kw, kb = jax.random.split(key, 3)
        scale = 1.0 / jnp.sqrt(fan_in)
        params[f"w{idx}"] = (jax.random.uniform(kw, (fan_in, fan_out), jnp.float32,
                                                minval=-1.0, maxval=1.0) * scale)
        params[f"b{idx}"] = (jax.random.uniform(kb, (1, fan_out), jnp.float32,
                                                minval=-1.0, maxval=1.0) * scale)
    return params


def mlp_reference(x, p, precision=jax.lax.Precision.HIGHEST):
    dot = functools.partial(jnp.dot, precision=precision)
    h = dot(x, p["w1"]) + p["b1"]
    h = dot(h, p["w2"]) + p["b2"]
    h = dot(h, p["w3"]) + p["b3"]
    h = dot(h, p["w4"]) + p["b4"]
    h = dot(h, p["w5"]) + p["b5"]
    return h


if __name__ == "__main__":
    key = jax.random.PRNGKey(0)
    key, kx1, kp1, kx2, kp2 = jax.random.split(key, 5)

    # --- Case 1: small spec-consistent shapes, single full-batch tile. ---
    B1, F1 = 16, 64
    x1 = jax.random.normal(kx1, (B1, F1), jnp.float32)
    p1 = init_params(kp1, F1)
    fwd1 = make_mlp_forward(p1)
    out1 = jax.block_until_ready(fwd1(x1))
    ref1 = mlp_reference(x1, p1)
    assert out1.shape == (B1, 1), out1.shape
    err1 = float(jnp.max(jnp.abs(out1 - ref1)))
    scale1 = float(jnp.max(jnp.abs(ref1)))
    assert err1 <= 1e-3 * max(scale1, 1.0), (err1, scale1)

    # --- Case 2: tiled grid (>= 2 steps), CLIP ViT-L/14 width F = 768. ---
    B2, F2 = 512, 768
    x2 = jax.random.normal(kx2, (B2, F2), jnp.float32)
    p2 = init_params(kp2, F2)
    fwd2 = make_mlp_forward(p2)            # auto tile_b=256 -> 2 grid steps
    out2 = jax.block_until_ready(fwd2(x2))
    ref2 = mlp_reference(x2, p2)
    assert out2.shape == (B2, 1), out2.shape
    err2 = float(jnp.max(jnp.abs(out2 - ref2)))
    scale2 = float(jnp.max(jnp.abs(ref2)))
    assert err2 <= 2e-3 * max(scale2, 1.0), (err2, scale2)

    print("KERNEL_OK")
</pallas_src>

<mosaic_0001>
module attributes {stable_mosaic.version = 11 : i64} {
  func.func @folded_mlp_kernel(%arg0: i32, %arg1: memref<16x64xf32, #tpu.memory_space<vmem>>, %arg2: memref<64x1xf32, #tpu.memory_space<vmem>>, %arg3: memref<1x1xf32, #tpu.memory_space<vmem>>, %arg4: memref<16x1xf32, #tpu.memory_space<vmem>>) attributes {dimension_semantics = [#tpu.dimension_semantics<parallel>], iteration_bounds = array<i64: 1>, scalar_prefetch = 0 : i64, scratch_operands = 0 : i64, tpu.core_type = #tpu.core_type<tc>, window_params = [{transform_indices = @transform_0, window_bounds = array<i64: 16, 64>}, {pipeline_mode = #tpu.pipeline_mode<synchronous>, transform_indices = @transform_1, window_bounds = array<i64: 64, 1>}, {pipeline_mode = #tpu.pipeline_mode<synchronous>, transform_indices = @transform_2, window_bounds = array<i64: 1, 1>}, {transform_indices = @transform_3, window_bounds = array<i64: 16, 1>}]} {
    %c0 = arith.constant 0 : index
    %c0_0 = arith.constant 0 : index
    %0 = vector.load %arg1[%c0, %c0_0] : memref<16x64xf32, #tpu.memory_space<vmem>>, vector<16x64xf32>
    %c0_1 = arith.constant 0 : index
    %c0_2 = arith.constant 0 : index
    %1 = vector.load %arg2[%c0_1, %c0_2] : memref<64x1xf32, #tpu.memory_space<vmem>>, vector<64x1xf32>
    %cst = arith.constant dense<0.000000e+00> : vector<16x1xf32>
    %2 = tpu.matmul %0, %1, %cst {dimension_numbers = #tpu.dot_dimension_numbers<[1], [0], [0], [1], [0, 0, 1, 1], [], []>, precision = #tpu.contract_precision<fp32>} : vector<16x64xf32>, vector<64x1xf32>, vector<16x1xf32> -> vector<16x1xf32>
    %c0_3 = arith.constant 0 : index
    %c0_4 = arith.constant 0 : index
    %3 = vector.load %arg3[%c0_3, %c0_4] : memref<1x1xf32, #tpu.memory_space<vmem>>, vector<1x1xf32>
    %4 = vector.broadcast %3 : vector<1x1xf32> to vector<16x1xf32>
    %5 = arith.addf %2, %4 : vector<16x1xf32>
    %c0_5 = arith.constant 0 : index
    %c0_6 = arith.constant 0 : index
    %6 = vector.load %arg4[%c0_5, %c0_6] : memref<16x1xf32, #tpu.memory_space<vmem>>, vector<16x1xf32>
    tpu.vector_store %arg4[%c0_5, %c0_6], %5 {strides = array<i32>} : memref<16x1xf32, #tpu.memory_space<vmem>>, vector<16x1xf32>,
    return
  }
  func.func @transform_0(%arg0: i32) -> (i32, i32) {
    %c0_i32 = arith.constant 0 : i32
    %c0_i32_0 = arith.constant 0 : i32
    return %arg0, %c0_i32 : i32, i32
  }
  func.func @transform_1(%arg0: i32) -> (i32, i32) {
    %c0_i32 = arith.constant 0 : i32
    %c0_i32_0 = arith.constant 0 : i32
    %c0_i32_1 = arith.constant 0 : i32
    return %c0_i32, %c0_i32_0 : i32, i32
  }
  func.func @transform_2(%arg0: i32) -> (i32, i32) {
    %c0_i32 = arith.constant 0 : i32
    %c0_i32_0 = arith.constant 0 : i32
    %c0_i32_1 = arith.constant 0 : i32
    return %c0_i32, %c0_i32_0 : i32, i32
  }
  func.func @transform_3(%arg0: i32) -> (i32, i32) {
    %c0_i32 = arith.constant 0 : i32
    %c0_i32_0 = arith.constant 0 : i32
    return %arg0, %c0_i32 : i32, i32
  }
}

</mosaic_0001>

<llo_original>
// kernel: _lambda_.1
$region0: #{_lambda_.1}
  #allocation0 [shape = 'u32[]', space=smem, size = 0x4, offset = 0x4, fixed_abs, tag = 'smem constant byte address 0x4 - core index']
  #allocation1 [shape = 'u32[144,128]{1,0:T(1,128)}', space=vmem, size = 0x12000, scoped, tag = 'internal scratch']
  #allocation2 [shape = 'f32[1,1]{1,0:T(1,128)S(1)}', space=vmem, size = 0x200, scoped, tag = 'scoped memory for _lambda_.1']
  %s0 = inlined_call_operand.hbm [shape: f32[16,64], index: 0, kind: input, shape index: {}]
  %s1 = inlined_call_operand.hbm [shape: f32[64,1], index: 1, kind: input, shape index: {}]
  %s2 = inlined_call_operand.<no memory space> [shape: f32[1,1], index: 2, kind: input, shape index: {}]
  %s3 = inlined_call_operand.vmem [shape: f32[16,1], index: 3, kind: output, shape index: {}]
  %s4 = sld [smem:[#allocation0]]
  $region30: #{_lambda_.1} parent=0
    _
  %s6 = ssub.s32 1, %s4
  %s7 = scalar_select 0, %s6, %s4
  %v8 = vstv %s2
  %9 = vst [vmem:[#allocation2] sm:$0x1] %v8
  $region1: #{_lambda_.1} parent=0
    #allocation3 [shape = 'u8[8192]{0}', space=vmem, size = 0x2000, scoped, tag = 'input window, operand 0, single buffered']
    #allocation4 [shape = 's32[1]{0}', space=sflag, size = 0x4, scoped, tag = 'scoped memory for _lambda_.1']
    #allocation5 [shape = 'u8[32768]{0}', space=vmem, size = 0x8000, scoped, tag = 'input window, operand 1, single buffered']
    #allocation6 [shape = 's32[1]{0}', space=sflag, size = 0x4, scoped, tag = 'scoped memory for _lambda_.1']
    %10 = vsyncpa [#allocation4], 0
    %11 = vsyncpa [#allocation6], 0
    // Predicated region
    $region2: #{_lambda_.1} parent=1 // pred_check
      _
    $region3: #{_lambda_.1} parent=1 // pred_check_branch
      %13 = sbr.rel (0) target = $region5
    $region4: #{_lambda_.1} parent=1 // pred_region
      %s15 = ssub.s32 256, 256
      %16 = vsyncadd [#allocation4], %s15
      %s17 = sshll.u32 [#allocation3], 4
      %s18 = int_to_ptr.vmem [resolvable:$true] %s17
      %23 = dma.hbm_to_vmem [thread:$0]  %s0, 256, %s18, [#allocation4], 128, 128, 8
    $region5: #{_lambda_.1} parent=1 // pred_fallthru
      _
    // Predicated region
    $region6: #{_lambda_.1} parent=1 // pred_check
      _
    $region7: #{_lambda_.1} parent=1 // pred_check_branch
      %25 = sbr.rel (0) target = $region9
    $region8: #{_lambda_.1} parent=1 // pred_region
      %s27 = ssub.s32 1024, 1024
      %28 = vsyncadd [#allocation6], %s27
      %s29 = sshll.u32 [#allocation5], 4
      %s30 = int_to_ptr.vmem [resolvable:$true] %s29
      %35 = dma.hbm_to_vmem [thread:$0]  %s1, 1024, %s30, [#allocation6], 128, 128, 8
    $region9: #{_lambda_.1} parent=1 // pred_fallthru
      _
    // Predicated region
    $region10: #{_lambda_.1} parent=1 // pred_check
      _
    $region11: #{_lambda_.1} parent=1 // pred_check_branch
      %37 = sbr.rel (0) target = $region13
    $region12: #{_lambda_.1} parent=1 // pred_region
      _
    $region13: #{_lambda_.1} parent=1 // pred_fallthru
      _
    // Predicated region
    $region14: #{_lambda_.1} parent=1 // pred_check
      _
    $region15: #{_lambda_.1} parent=1 // pred_check_branch
      %39 = sbr.rel (0) target = $region17
    $region16: #{_lambda_.1} parent=1 // pred_region
      %40 = dma.done [#allocation4], 256
    $region17: #{_lambda_.1} parent=1 // pred_fallthru
      _
    // Predicated region
    $region18: #{_lambda_.1} parent=1 // pred_check
      _
    $region19: #{_lambda_.1} parent=1 // pred_check_branch
      %42 = sbr.rel (0) target = $region21
    $region20: #{_lambda_.1} parent=1 // pred_region
      %43 = dma.done [#allocation6], 1024
    $region21: #{_lambda_.1} parent=1 // pred_fallthru
      _
    %v44 = vld [vmem:[#allocation3] sm:$0xff]
    %v45 = vld [vmem:[#allocation3 + $0x8] sm:$0xff]
    %v46 = vld [vmem:[#allocation5] sm:$0xff]
    %v47 = vld [vmem:[#allocation5 + $0x8] sm:$0xff]
    %v48 = vld [vmem:[#allocation5 + $0x10] sm:$0xff]
    %v49 = vld [vmem:[#allocation5 + $0x18] sm:$0xff]
    %v50 = vld [vmem:[#allocation5 + $0x20] sm:$0xff]
    %v51 = vld [vmem:[#allocation5 + $0x28] sm:$0xff]
    %v52 = vld [vmem:[#allocation5 + $0x30] sm:$0xff]
    %v53 = vld [vmem:[#allocation5 + $0x38] sm:$0xff]
    %v54 = vld [vmem:[#allocation2] sm:$0x1]
    %v56 = vlaneseq
    %v57 = vshrl.u32 %v56, 7
    %v58 = vsub.s32 0, %v57
    %v59 = vrot.slane %v54, %v58
    %vm61 = vcmask 523264
    %v63 = vsel %vm61, %v44, 0
    %v66 = vsel %vm61, %v45, 0
    %68 = vmatprep.subr.mxu0 0.0
    %v69 = vand.u32 %v46, 4294901760
    %70 = vmatpush1.msra.mxu0 %v69
    %71 = vmatprep.subr.mxu0 0.0
    %v72 = vand.u32 %v47, 4294901760
    %73 = vmatpush1.msra.mxu0 %v72
    %74 = vmatprep.subr.mxu0 0.0
    %v75 = vand.u32 %v48, 4294901760
    %76 = vmatpush1.msra.mxu0 %v75
    %77 = vmatprep.subr.mxu0 0.0
    %v78 = vand.u32 %v49, 4294901760
    %79 = vmatpush1.msra.mxu0 %v78
    %80 = vmatprep.subr.mxu0 0.0
    %v81 = vand.u32 %v50, 4294901760
    %82 = vmatpush1.msra.mxu0 %v81
    %83 = vmatprep.subr.mxu0 0.0
    %v84 = vand.u32 %v51, 4294901760
    %85 = vmatpush1.msra.mxu0 %v84
    %86 = vmatprep.subr.mxu0 0.0
    %v87 = vand.u32 %v52, 4294901760
    %88 = vmatpush1.msra.mxu0 %v87
    %89 = vmatprep.subr.mxu0 0.0
    %v90 = vand.u32 %v53, 4294901760
    %91 = vmatpush1.msra.mxu0 %v90
    %92 = vmatprep.subr.mxu0 0.0
    %93 = vmatpush1.msra.mxu0 0.0
    %94 = vmatprep.subr.mxu0 0.0
    %95 = vmatpush1.msra.mxu0 0.0
    %96 = vmatprep.subr.mxu0 0.0
    %97 = vmatpush1.msra.mxu0 0.0
    %98 = vmatprep.subr.mxu0 0.0
    %99 = vmatpush1.msra.mxu0 0.0
    %100 = vmatprep.subr.mxu0 0.0
    %101 = vmatpush1.msra.mxu0 0.0
    %102 = vmatprep.subr.mxu0 0.0
    %103 = vmatpush1.msra.mxu0 0.0
    %104 = vmatprep.subr.mxu0 0.0
    %105 = vmatpush1.msra.mxu0 0.0
    %106 = vmatprep.subr.mxu0 0.0
    %107 = vmatpush1.msra.mxu0 0.0
    %108 = vmatprep.subr.mxu0 0.0
    %109 = vmatpush1.msra.mxu0 0.0
    %110 = vmatprep.subr.mxu0 0.0
    %111 = vmatpush1.msra.mxu0 0.0
    %112 = vmatprep.subr.mxu0 0.0
    %113 = vmatpush1.msra.mxu0 0.0
    %114 = vmatprep.subr.mxu0 0.0
    %115 = vmatpush1.msra.mxu0 0.0
    %116 = vmatprep.subr.mxu0 0.0
    %117 = vmatpush1.msra.mxu0 0.0
    %118 = vmatprep.subr.mxu0 0.0
    %119 = vmatpush1.msra.mxu0 0.0
    %120 = vmatprep.subr.mxu0 0.0
    %121 = vmatpush1.msra.mxu0 0.0
    %122 = vmatprep.subr.mxu0 0.0
    %123 = vmatpush1.msra.mxu0 0.0
    %124 = vmatprep.subr.mxu0 0.0
    %125 = vmatpush1.msra.mxu0 0.0
    %126 = vmatprep.subr.mxu0 0.0
    %127 = vmatpush1.msra.mxu0 0.0
    %128 = vmatprep.subr.mxu0 0.0
    %129 = vmatpush1.msra.mxu0 0.0
    %130 = vmatprep.subr.mxu0 0.0
    %131 = vmatpush1.msra.mxu0 0.0
    %132 = vmatprep.subr.mxu0 0.0
    %133 = vmatpush1.msra.mxu0 0.0
    %134 = vmatprep.subr.mxu0 0.0
    %135 = vmatpush1.msra.mxu0 0.0
    %136 = vmatprep.subr.mxu0 0.0
    %137 = vmatpush1.msra.mxu0 0.0
    %138 = vmatprep.subr.mxu0 0.0
    %139 = vmatpush1.msra.mxu0 0.0
    %140 = vmatprep.mubr.f32.mxu0 0.0
    %v141 = vand.u32 %v63, 4294901760
    %v142 = vsub.f32 %v63, %v141
    %v143 = vand.u32 %v142, 4294901760
    %v144 = vsub.f32 %v142, %v143
    %v145 = vand.u32 %v144, 4294901760
    %146 = vmatmul.mubr.f32.gmra.mrb[0].mxu0 %v145
    %v147 = vpop.f32.mrb[0].mxu0
    %v148 = vadd.f32 %v59, %v147
    %v149 = vpop.f32.mrb[0].mxu0
    %150 = vmatprep.mubr.f32.mxu0 0.0
    %v151 = vand.u32 %v66, 4294901760
    %v152 = vsub.f32 %v66, %v151
    %v153 = vand.u32 %v152, 4294901760
    %v154 = vsub.f32 %v152, %v153
    %v155 = vand.u32 %v154, 4294901760
    %156 = vmatmul.mubr.f32.gmra.mrb[0].mxu0 %v155
    %v157 = vpop.f32.mrb[0].mxu0
    %v158 = vadd.f32 %v59, %v157
    %v159 = vpop.f32.mrb[0].mxu0
    %160 = vdwg.mxu0
    %161 = vmatprep.subr.mxu0 0.0
    %v162 = vand.u32 %v46, 4294901760
    %v163 = vsub.f32 %v46, %v162
    %v164 = vand.u32 %v163, 4294901760
    %v165 = vsub.f32 %v163, %v164
    %v166 = vand.u32 %v165, 4294901760
    %167 = vmatpush1.msra.mxu0 %v166
    %168 = vmatprep.subr.mxu0 0.0
    %v169 = vand.u32 %v47, 4294901760
    %v170 = vsub.f32 %v47, %v169
    %v171 = vand.u32 %v170, 4294901760
    %v172 = vsub.f32 %v170, %v171
    %v173 = vand.u32 %v172, 4294901760
    %174 = vmatpush1.msra.mxu0 %v173
    %175 = vmatprep.subr.mxu0 0.0
    %v176 = vand.u32 %v48, 4294901760
    %v177 = vsub.f32 %v48, %v176
    %v178 = vand.u32 %v177, 4294901760
    %v179 = vsub.f32 %v177, %v178
    %v180 = vand.u32 %v179, 4294901760
    %181 = vmatpush1.msra.mxu0 %v180
    %182 = vmatprep.subr.mxu0 0.0
    %v183 = vand.u32 %v49, 4294901760
    %v184 = vsub.f32 %v49, %v183
    %v185 = vand.u32 %v184, 4294901760
    %v186 = vsub.f32 %v184, %v185
    %v187 = vand.u32 %v186, 4294901760
    %188 = vmatpush1.msra.mxu0 %v187
    %189 = vmatprep.subr.mxu0 0.0
    %v190 = vand.u32 %v50, 4294901760
    %v191 = vsub.f32 %v50, %v190
    %v192 = vand.u32 %v191, 4294901760
    %v193 = vsub.f32 %v191, %v192
    %v194 = vand.u32 %v193, 4294901760
    %195 = vmatpush1.msra.mxu0 %v194
    %196 = vmatprep.subr.mxu0 0.0
    %v197 = vand.u32 %v51, 4294901760
    %v198 = vsub.f32 %v51, %v197
    %v199 = vand.u32 %v198, 4294901760
    %v200 = vsub.f32 %v198, %v199
    %v201 = vand.u32 %v200, 4294901760
    %202 = vmatpush1.msra.mxu0 %v201
    %203 = vmatprep.subr.mxu0 0.0
    %v204 = vand.u32 %v52, 4294901760
    %v205 = vsub.f32 %v52, %v204
    %v206 = vand.u32 %v205, 4294901760
    %v207 = vsub.f32 %v205, %v206
    %v208 = vand.u32 %v207, 4294901760
    %209 = vmatpush1.msra.mxu0 %v208
    %210 = vmatprep.subr.mxu0 0.0
    %v211 = vand.u32 %v53, 4294901760
    %v212 = vsub.f32 %v53, %v211
    %v213 = vand.u32 %v212, 4294901760
    %v214 = vsub.f32 %v212, %v213
    %v215 = vand.u32 %v214, 4294901760
    %216 = vmatpush1.msra.mxu0 %v215
    %217 = vmatprep.subr.mxu0 0.0
    %218 = vmatpush1.msra.mxu0 0.0
    %219 = vmatprep.subr.mxu0 0.0
    %220 = vmatpush1.msra.mxu0 0.0
    %221 = vmatprep.subr.mxu0 0.0
    %222 = vmatpush1.msra.mxu0 0.0
    %223 = vmatprep.subr.mxu0 0.0
    %224 = vmatpush1.msra.mxu0 0.0
    %225 = vmatprep.subr.mxu0 0.0
    %226 = vmatpush1.msra.mxu0 0.0
    %227 = vmatprep.subr.mxu0 0.0
    %228 = vmatpush1.msra.mxu0 0.0
    %229 = vmatprep.subr.mxu0 0.0
    %230 = vmatpush1.msra.mxu0 0.0
    %231 = vmatprep.subr.mxu0 0.0
    %232 = vmatpush1.msra.mxu0 0.0
    %233 = vmatprep.subr.mxu0 0.0
    %234 = vmatpush1.msra.mxu0 0.0
    %235 = vmatprep.subr.mxu0 0.0
    %236 = vmatpush1.msra.mxu0 0.0
    %237 = vmatprep.subr.mxu0 0.0
    %238 = vmatpush1.msra.mxu0 0.0
    %239 = vmatprep.subr.mxu0 0.0
    %240 = vmatpush1.msra.mxu0 0.0
    %241 = vmatprep.subr.mxu0 0.0
    %242 = vmatpush1.msra.mxu0 0.0
    %243 = vmatprep.subr.mxu0 0.0
    %244 = vmatpush1.msra.mxu0 0.0
    %245 = vmatprep.subr.mxu0 0.0
    %246 = vmatpush1.msra.mxu0 0.0
    %247 = vmatprep.subr.mxu0 0.0
    %248 = vmatpush1.msra.mxu0 0.0
    %249 = vmatprep.subr.mxu0 0.0
    %250 = vmatpush1.msra.mxu0 0.0
    %251 = vmatprep.subr.mxu0 0.0
    %252 = vmatpush1.msra.mxu0 0.0
    %253 = vmatprep.subr.mxu0 0.0
    %254 = vmatpush1.msra.mxu0 0.0
    %255 = vmatprep.subr.mxu0 0.0
    %256 = vmatpush1.msra.mxu0 0.0
    %257 = vmatprep.subr.mxu0 0.0
    %258 = vmatpush1.msra.mxu0 0.0
    %259 = vmatprep.subr.mxu0 0.0
    %260 = vmatpush1.msra.mxu0 0.0
    %261 = vmatprep.subr.mxu0 0.0
    %262 = vmatpush1.msra.mxu0 0.0
    %263 = vmatprep.subr.mxu0 0.0
    %264 = vmatpush1.msra.mxu0 0.0
    %265 = vmatprep.mubr.f32.mxu0 0.0
    %v266 = vand.u32 %v63, 4294901760
    %267 = vmatmul.mubr.f32.gmra.mrb[0].mxu0 %v266
    %v268 = vpop.f32.mrb[0].mxu0
    %v269 = vadd.f32 %v148, %v268
    %v270 = vpop.f32.mrb[0].mxu0
    %271 = vmatprep.mubr.f32.mxu0 0.0
    %v272 = vand.u32 %v66, 4294901760
    %273 = vmatmul.mubr.f32.gmra.mrb[0].mxu0 %v272
    %v274 = vpop.f32.mrb[0].mxu0
    %v275 = vadd.f32 %v158, %v274
    %v276 = vpop.f32.mrb[0].mxu0
    %277 = vdwg.mxu0
    %278 = vmatprep.subr.mxu0 0.0
    %v279 = vand.u32 %v46, 4294901760
    %v280 = vsub.f32 %v46, %v279
    %281 = vmatpush1.msra.mxu0 %v280
    %282 = vmatprep.subr.mxu0 0.0
    %v283 = vand.u32 %v47, 4294901760
    %v284 = vsub.f32 %v47, %v283
    %285 = vmatpush1.msra.mxu0 %v284
    %286 = vmatprep.subr.mxu0 0.0
    %v287 = vand.u32 %v48, 4294901760
    %v288 = vsub.f32 %v48, %v287
    %289 = vmatpush1.msra.mxu0 %v288
    %290 = vmatprep.subr.mxu0 0.0
    %v291 = vand.u32 %v49, 4294901760
    %v292 = vsub.f32 %v49, %v291
    %293 = vmatpush1.msra.mxu0 %v292
    %294 = vmatprep.subr.mxu0 0.0
    %v295 = vand.u32 %v50, 4294901760
    %v296 = vsub.f32 %v50, %v295
    %297 = vmatpush1.msra.mxu0 %v296
    %298 = vmatprep.subr.mxu0 0.0
    %v299 = vand.u32 %v51, 4294901760
    %v300 = vsub.f32 %v51, %v299
    %301 = vmatpush1.msra.mxu0 %v300
    %302 = vmatprep.subr.mxu0 0.0
    %v303 = vand.u32 %v52, 4294901760
    %v304 = vsub.f32 %v52, %v303
    %305 = vmatpush1.msra.mxu0 %v304
    %306 = vmatprep.subr.mxu0 0.0
    %v307 = vand.u32 %v53, 4294901760
    %v308 = vsub.f32 %v53, %v307
    %309 = vmatpush1.msra.mxu0 %v308
    %310 = vmatprep.subr.mxu0 0.0
    %311 = vmatpush1.msra.mxu0 0.0
    %312 = vmatprep.subr.mxu0 0.0
    %313 = vmatpush1.msra.mxu0 0.0
    %314 = vmatprep.subr.mxu0 0.0
    %315 = vmatpush1.msra.mxu0 0.0
    %316 = vmatprep.subr.mxu0 0.0
    %317 = vmatpush1.msra.mxu0 0.0
    %318 = vmatprep.subr.mxu0 0.0
    %319 = vmatpush1.msra.mxu0 0.0
    %320 = vmatprep.subr.mxu0 0.0
    %321 = vmatpush1.msra.mxu0 0.0
    %322 = vmatprep.subr.mxu0 0.0
    %323 = vmatpush1.msra.mxu0 0.0
    %324 = vmatprep.subr.mxu0 0.0
    %325 = vmatpush1.msra.mxu0 0.0
    %326 = vmatprep.subr.mxu0 0.0
    %327 = vmatpush1.msra.mxu0 0.0
    %328 = vmatprep.subr.mxu0 0.0
    %329 = vmatpush1.msra.mxu0 0.0
    %330 = vmatprep.subr.mxu0 0.0
    %331 = vmatpush1.msra.mxu0 0.0
    %332 = vmatprep.subr.mxu0 0.0
    %333 = vmatpush1.msra.mxu0 0.0
    %334 = vmatprep.subr.mxu0 0.0
    %335 = vmatpush1.msra.mxu0 0.0
    %336 = vmatprep.subr.mxu0 0.0
    %337 = vmatpush1.msra.mxu0 0.0
    %338 = vmatprep.subr.mxu0 0.0
    %339 = vmatpush1.msra.mxu0 0.0
    %340 = vmatprep.subr.mxu0 0.0
    %341 = vmatpush1.msra.mxu0 0.0
    %342 = vmatprep.subr.mxu0 0.0
    %343 = vmatpush1.msra.mxu0 0.0
    %344 = vmatprep.subr.mxu0 0.0
    %345 = vmatpush1.msra.mxu0 0.0
    %346 = vmatprep.subr.mxu0 0.0
    %347 = vmatpush1.msra.mxu0 0.0
    %348 = vmatprep.subr.mxu0 0.0
    %349 = vmatpush1.msra.mxu0 0.0
    %350 = vmatprep.subr.mxu0 0.0
    %351 = vmatpush1.msra.mxu0 0.0
    %352 = vmatprep.subr.mxu0 0.0
    %353 = vmatpush1.msra.mxu0 0.0
    %354 = vmatprep.subr.mxu0 0.0
    %355 = vmatpush1.msra.mxu0 0.0
    %356 = vmatprep.subr.mxu0 0.0
    %357 = vmatpush1.msra.mxu0 0.0
    %358 = vmatprep.mubr.f32.mxu0 0.0
    %v359 = vand.u32 %v63, 4294901760
    %v360 = vsub.f32 %v63, %v359
    %361 = vmatmul.mubr.f32.gmra.mrb[0].mxu0 %v360
    %v362 = vpop.f32.mrb[0].mxu0
    %v363 = vadd.f32 %v269, %v362
    %v364 = vpop.f32.mrb[0].mxu0
    %365 = vmatprep.mubr.f32.mxu0 0.0
    %v366 = vand.u32 %v66, 4294901760
    %v367 = vsub.f32 %v66, %v366
    %368 = vmatmul.mubr.f32.gmra.mrb[0].mxu0 %v367
    %v369 = vpop.f32.mrb[0].mxu0
    %v370 = vadd.f32 %v275, %v369
    %v371 = vpop.f32.mrb[0].mxu0
    %372 = vdwg.mxu0
    %373 = vmatprep.subr.mxu0 0.0
    %v374 = vand.u32 %v46, 4294901760
    %375 = vmatpush1.msra.mxu0 %v374
    %376 = vmatprep.subr.mxu0 0.0
    %v377 = vand.u32 %v47, 4294901760
    %378 = vmatpush1.msra.mxu0 %v377
    %379 = vmatprep.subr.mxu0 0.0
    %v380 = vand.u32 %v48, 4294901760
    %381 = vmatpush1.msra.mxu0 %v380
    %382 = vmatprep.subr.mxu0 0.0
    %v383 = vand.u32 %v49, 4294901760
    %384 = vmatpush1.msra.mxu0 %v383
    %385 = vmatprep.subr.mxu0 0.0
    %v386 = vand.u32 %v50, 4294901760
    %387 = vmatpush1.msra.mxu0 %v386
    %388 = vmatprep.subr.mxu0 0.0
    %v389 = vand.u32 %v51, 4294901760
    %390 = vmatpush1.msra.mxu0 %v389
    %391 = vmatprep.subr.mxu0 0.0
    %v392 = vand.u32 %v52, 4294901760
    %393 = vmatpush1.msra.mxu0 %v392
    %394 = vmatprep.subr.mxu0 0.0
    %v395 = vand.u32 %v53, 4294901760
    %396 = vmatpush1.msra.mxu0 %v395
    %397 = vmatprep.subr.mxu0 0.0
    %398 = vmatpush1.msra.mxu0 0.0
    %399 = vmatprep.subr.mxu0 0.0
    %400 = vmatpush1.msra.mxu0 0.0
    %401 = vmatprep.subr.mxu0 0.0
    %402 = vmatpush1.msra.mxu0 0.0
    %403 = vmatprep.subr.mxu0 0.0
    %404 = vmatpush1.msra.mxu0 0.0
    %405 = vmatprep.subr.mxu0 0.0
    %406 = vmatpush1.msra.mxu0 0.0
    %407 = vmatprep.subr.mxu0 0.0
    %408 = vmatpush1.msra.mxu0 0.0
    %409 = vmatprep.subr.mxu0 0.0
    %410 = vmatpush1.msra.mxu0 0.0
    %411 = vmatprep.subr.mxu0 0.0
    %412 = vmatpush1.msra.mxu0 0.0
    %413 = vmatprep.subr.mxu0 0.0
    %414 = vmatpush1.msra.mxu0 0.0
    %415 = vmatprep.subr.mxu0 0.0
    %416 = vmatpush1.msra.mxu0 0.0
    %417 = vmatprep.subr.mxu0 0.0
    %418 = vmatpush1.msra.mxu0 0.0
    %419 = vmatprep.subr.mxu0 0.0
    %420 = vmatpush1.msra.mxu0 0.0
    %421 = vmatprep.subr.mxu0 0.0
    %422 = vmatpush1.msra.mxu0 0.0
    %423 = vmatprep.subr.mxu0 0.0
    %424 = vmatpush1.msra.mxu0 0.0
    %425 = vmatprep.subr.mxu0 0.0
    %426 = vmatpush1.msra.mxu0 0.0
    %427 = vmatprep.subr.mxu0 0.0
    %428 = vmatpush1.msra.mxu0 0.0
    %429 = vmatprep.subr.mxu0 0.0
    %430 = vmatpush1.msra.mxu0 0.0
    %431 = vmatprep.subr.mxu0 0.0
    %432 = vmatpush1.msra.mxu0 0.0
    %433 = vmatprep.subr.mxu0 0.0
    %434 = vmatpush1.msra.mxu0 0.0
    %435 = vmatprep.subr.mxu0 0.0
    %436 = vmatpush1.msra.mxu0 0.0
    %437 = vmatprep.subr.mxu0 0.0
    %438 = vmatpush1.msra.mxu0 0.0
    %439 = vmatprep.subr.mxu0 0.0
    %440 = vmatpush1.msra.mxu0 0.0
    %441 = vmatprep.subr.mxu0 0.0
    %442 = vmatpush1.msra.mxu0 0.0
    %443 = vmatprep.subr.mxu0 0.0
    %444 = vmatpush1.msra.mxu0 0.0
    %445 = vmatprep.mubr.f32.mxu0 0.0
    %v446 = vand.u32 %v63, 4294901760
    %v447 = vsub.f32 %v63, %v446
    %v448 = vand.u32 %v447, 4294901760
    %449 = vmatmul.mubr.f32.gmra.mrb[0].mxu0 %v448
    %v450 = vpop.f32.mrb[0].mxu0
    %v451 = vadd.f32 %v363, %v450
    %v452 = vpop.f32.mrb[0].mxu0
    %453 = vmatprep.mubr.f32.mxu0 0.0
    %v454 = vand.u32 %v66, 4294901760
    %v455 = vsub.f32 %v66, %v454
    %v456 = vand.u32 %v455, 4294901760
    %457 = vmatmul.mubr.f32.gmra.mrb[0].mxu0 %v456
    %v458 = vpop.f32.mrb[0].mxu0
    %v459 = vadd.f32 %v370, %v458
    %v460 = vpop.f32.mrb[0].mxu0
    %461 = vdwg.mxu0
    %462 = vmatprep.subr.mxu0 0.0
    %v463 = vand.u32 %v46, 4294901760
    %v464 = vsub.f32 %v46, %v463
    %v465 = vand.u32 %v464, 4294901760
    %466 = vmatpush1.msra.mxu0 %v465
    %467 = vmatprep.subr.mxu0 0.0
    %v468 = vand.u32 %v47, 4294901760
    %v469 = vsub.f32 %v47, %v468
    %v470 = vand.u32 %v469, 4294901760
    %471 = vmatpush1.msra.mxu0 %v470
    %472 = vmatprep.subr.mxu0 0.0
    %v473 = vand.u32 %v48, 4294901760
    %v474 = vsub.f32 %v48, %v473
    %v475 = vand.u32 %v474, 4294901760
    %476 = vmatpush1.msra.mxu0 %v475
    %477 = vmatprep.subr.mxu0 0.0
    %v478 = vand.u32 %v49, 4294901760
    %v479 = vsub.f32 %v49, %v478
    %v480 = vand.u32 %v479, 4294901760
    %481 = vmatpush1.msra.mxu0 %v480
    %482 = vmatprep.subr.mxu0 0.0
    %v483 = vand.u32 %v50, 4294901760
    %v484 = vsub.f32 %v50, %v483
    %v485 = vand.u32 %v484, 4294901760
    %486 = vmatpush1.msra.mxu0 %v485
    %487 = vmatprep.subr.mxu0 0.0
    %v488 = vand.u32 %v51, 4294901760
    %v489 = vsub.f32 %v51, %v488
    %v490 = vand.u32 %v489, 4294901760
    %491 = vmatpush1.msra.mxu0 %v490
    %492 = vmatprep.subr.mxu0 0.0
    %v493 = vand.u32 %v52, 4294901760
    %v494 = vsub.f32 %v52, %v493
    %v495 = vand.u32 %v494, 4294901760
    %496 = vmatpush1.msra.mxu0 %v495
    %497 = vmatprep.subr.mxu0 0.0
    %v498 = vand.u32 %v53, 4294901760
    %v499 = vsub.f32 %v53, %v498
    %v500 = vand.u32 %v499, 4294901760
    %501 = vmatpush1.msra.mxu0 %v500
    %502 = vmatprep.subr.mxu0 0.0
    %503 = vmatpush1.msra.mxu0 0.0
    %504 = vmatprep.subr.mxu0 0.0
    %505 = vmatpush1.msra.mxu0 0.0
    %506 = vmatprep.subr.mxu0 0.0
    %507 = vmatpush1.msra.mxu0 0.0
    %508 = vmatprep.subr.mxu0 0.0
    %509 = vmatpush1.msra.mxu0 0.0
    %510 = vmatprep.subr.mxu0 0.0
    %511 = vmatpush1.msra.mxu0 0.0
    %512 = vmatprep.subr.mxu0 0.0
    %513 = vmatpush1.msra.mxu0 0.0
    %514 = vmatprep.subr.mxu0 0.0
    %515 = vmatpush1.msra.mxu0 0.0
    %516 = vmatprep.subr.mxu0 0.0
    %517 = vmatpush1.msra.mxu0 0.0
    %518 = vmatprep.subr.mxu0 0.0
    %519 = vmatpush1.msra.mxu0 0.0
    %520 = vmatprep.subr.mxu0 0.0
    %521 = vmatpush1.msra.mxu0 0.0
    %522 = vmatprep.subr.mxu0 0.0
    %523 = vmatpush1.msra.mxu0 0.0
    %524 = vmatprep.subr.mxu0 0.0
    %525 = vmatpush1.msra.mxu0 0.0
    %526 = vmatprep.subr.mxu0 0.0
    %527 = vmatpush1.msra.mxu0 0.0
    %528 = vmatprep.subr.mxu0 0.0
    %529 = vmatpush1.msra.mxu0 0.0
    %530 = vmatprep.subr.mxu0 0.0
    %531 = vmatpush1.msra.mxu0 0.0
    %532 = vmatprep.subr.mxu0 0.0
    %533 = vmatpush1.msra.mxu0 0.0
    %534 = vmatprep.subr.mxu0 0.0
    %535 = vmatpush1.msra.mxu0 0.0
    %536 = vmatprep.subr.mxu0 0.0
    %537 = vmatpush1.msra.mxu0 0.0
    %538 = vmatprep.subr.mxu0 0.0
    %539 = vmatpush1.msra.mxu0 0.0
    %540 = vmatprep.subr.mxu0 0.0
    %541 = vmatpush1.msra.mxu0 0.0
    %542 = vmatprep.subr.mxu0 0.0
    %543 = vmatpush1.msra.mxu0 0.0
    %544 = vmatprep.subr.mxu0 0.0
    %545 = vmatpush1.msra.mxu0 0.0
    %546 = vmatprep.subr.mxu0 0.0
    %547 = vmatpush1.msra.mxu0 0.0
    %548 = vmatprep.subr.mxu0 0.0
    %549 = vmatpush1.msra.mxu0 0.0
    %550 = vmatprep.mubr.f32.mxu0 0.0
    %v551 = vand.u32 %v63, 4294901760
    %552 = vmatmul.mubr.f32.gmra.mrb[0].mxu0 %v551
    %v553 = vpop.f32.mrb[0].mxu0
    %v554 = vadd.f32 %v451, %v553
    %v555 = vpop.f32.mrb[0].mxu0
    %556 = vmatprep.mubr.f32.mxu0 0.0
    %v557 = vand.u32 %v66, 4294901760
    %558 = vmatmul.mubr.f32.gmra.mrb[0].mxu0 %v557
    %v559 = vpop.f32.mrb[0].mxu0
    %v560 = vadd.f32 %v459, %v559
    %v561 = vpop.f32.mrb[0].mxu0
    %562 = vdwg.mxu0
    %563 = vmatprep.subr.mxu0 0.0
    %v564 = vand.u32 %v46, 4294901760
    %565 = vmatpush1.msra.mxu0 %v564
    %566 = vmatprep.subr.mxu0 0.0
    %v567 = vand.u32 %v47, 4294901760
    %568 = vmatpush1.msra.mxu0 %v567
    %569 = vmatprep.subr.mxu0 0.0
    %v570 = vand.u32 %v48, 4294901760
    %571 = vmatpush1.msra.mxu0 %v570
    %572 = vmatprep.subr.mxu0 0.0
    %v573 = vand.u32 %v49, 4294901760
    %574 = vmatpush1.msra.mxu0 %v573
    %575 = vmatprep.subr.mxu0 0.0
    %v576 = vand.u32 %v50, 4294901760
    %577 = vmatpush1.msra.mxu0 %v576
    %578 = vmatprep.subr.mxu0 0.0
    %v579 = vand.u32 %v51, 4294901760
    %580 = vmatpush1.msra.mxu0 %v579
    %581 = vmatprep.subr.mxu0 0.0
    %v582 = vand.u32 %v52, 4294901760
    %583 = vmatpush1.msra.mxu0 %v582
    %584 = vmatprep.subr.mxu0 0.0
    %v585 = vand.u32 %v53, 4294901760
    %586 = vmatpush1.msra.mxu0 %v585
    %587 = vmatprep.subr.mxu0 0.0
    %588 = vmatpush1.msra.mxu0 0.0
    %589 = vmatprep.subr.mxu0 0.0
    %590 = vmatpush1.msra.mxu0 0.0
    %591 = vmatprep.subr.mxu0 0.0
    %592 = vmatpush1.msra.mxu0 0.0
    %593 = vmatprep.subr.mxu0 0.0
    %594 = vmatpush1.msra.mxu0 0.0
    %595 = vmatprep.subr.mxu0 0.0
    %596 = vmatpush1.msra.mxu0 0.0
    %597 = vmatprep.subr.mxu0 0.0
    %598 = vmatpush1.msra.mxu0 0.0
    %599 = vmatprep.subr.mxu0 0.0
    %600 = vmatpush1.msra.mxu0 0.0
    %601 = vmatprep.subr.mxu0 0.0
    %602 = vmatpush1.msra.mxu0 0.0
    %603 = vmatprep.subr.mxu0 0.0
    %604 = vmatpush1.msra.mxu0 0.0
    %605 = vmatprep.subr.mxu0 0.0
    %606 = vmatpush1.msra.mxu0 0.0
    %607 = vmatprep.subr.mxu0 0.0
    %608 = vmatpush1.msra.mxu0 0.0
    %609 = vmatprep.subr.mxu0 0.0
    %610 = vmatpush1.msra.mxu0 0.0
    %611 = vmatprep.subr.mxu0 0.0
    %612 = vmatpush1.msra.mxu0 0.0
    %613 = vmatprep.subr.mxu0 0.0
    %614 = vmatpush1.msra.mxu0 0.0
    %615 = vmatprep.subr.mxu0 0.0
    %616 = vmatpush1.msra.mxu0 0.0
    %617 = vmatprep.subr.mxu0 0.0
    %618 = vmatpush1.msra.mxu0 0.0
    %619 = vmatprep.subr.mxu0 0.0
    %620 = vmatpush1.msra.mxu0 0.0
    %621 = vmatprep.subr.mxu0 0.0
    %622 = vmatpush1.msra.mxu0 0.0
    %623 = vmatprep.subr.mxu0 0.0
    %624 = vmatpush1.msra.mxu0 0.0
    %625 = vmatprep.subr.mxu0 0.0
    %626 = vmatpush1.msra.mxu0 0.0
    %627 = vmatprep.subr.mxu0 0.0
    %628 = vmatpush1.msra.mxu0 0.0
    %629 = vmatprep.subr.mxu0 0.0
    %630 = vmatpush1.msra.mxu0 0.0
    %631 = vmatprep.subr.mxu0 0.0
    %632 = vmatpush1.msra.mxu0 0.0
    %633 = vmatprep.subr.mxu0 0.0
    %634 = vmatpush1.msra.mxu0 0.0
    %635 = vmatprep.mubr.f32.mxu0 0.0
    %v636 = vand.u32 %v63, 4294901760
    %637 = vmatmul.mubr.f32.gmra.mrb[0].mxu0 %v636
    %v638 = vpop.f32.mrb[0].mxu0
    %v639 = vadd.f32 %v554, %v638
    %v640 = vpop.f32.mrb[0].mxu0
    %641 = vmatprep.mubr.f32.mxu0 0.0
    %v642 = vand.u32 %v66, 4294901760
    %643 = vmatmul.mubr.f32.gmra.mrb[0].mxu0 %v642
    %v644 = vpop.f32.mrb[0].mxu0
    %v645 = vadd.f32 %v560, %v644
    %v646 = vpop.f32.mrb[0].mxu0
    %647 = vdwg.mxu0
    %vm648 = vcmask 7168
    %649 = vst.msk [vmem:[%s3] sm:$0xff] %vm648, %v639
    %650 = vst.msk [vmem:[%s3 + $0x8] sm:$0xff] %vm648, %v645
    // Predicated region
    $region22: #{_lambda_.1} parent=1 // pred_check
      _
    $region23: #{_lambda_.1} parent=1 // pred_check_branch
      %652 = sbr.rel (0) target = $region25
    $region24: #{_lambda_.1} parent=1 // pred_region
      _
    $region25: #{_lambda_.1} parent=1 // pred_fallthru
      _
    // Predicated region
    $region26: #{_lambda_.1} parent=1 // pred_check
      _
    $region27: #{_lambda_.1} parent=1 // pred_check_branch
      %654 = sbr.rel (0) target = $region29
    $region28: #{_lambda_.1} parent=1 // pred_region
      _
    $region29: #{_lambda_.1} parent=1 // pred_fallthru
      _
    %655 = vsyncpa [#allocation4], 1
    %656 = vsyncpa [#allocation6], 1

</llo_original>
